<compile_context>
chip_gen: v5e
topology: v5e:2x2
jax: 0.10.0
libtpu: 0.0.40
codegen_flags: <defaults>
</compile_context>

<pallas_src>
import functools

import jax
import jax.numpy as jnp
from jax.experimental import pallas as pl
from jax.experimental.pallas import tpu as pltpu

_LANE = 128      # lane quantum (last dim)
_SUBLANE = 8     # sublane quantum (second-to-last dim)


def _round_up(x: int, m: int) -> int:
    return (x + m - 1) // m * m


def _vmem_capacity_bytes() -> int:
    """Physical VMEM per TensorCore (v5e/v6e: 128 MiB, v7x: 64 MiB)."""
    try:
        return int(pltpu.get_tpu_info().vmem_capacity_bytes)
    except Exception:
        kind = jax.devices()[0].device_kind.lower()
        return (64 if "v7" in kind else 128) * 2**20


def _fused_mlp_kernel(x_ref, *refs, n_layers: int):
    """Whole MLP for one batch tile.

    refs = (w_0, b_0, ..., w_{L-1}, b_{L-1}, o_ref)
      x_ref: (TILE_B, P0) in matmul dtype   w_i: (P_i, P_{i+1})   b_i: (1, P_{i+1}) f32
      o_ref: (TILE_B, P_L)

    Activations stay in VMEM/vregs for the whole chain. Matmuls run in the weights'
    dtype (bf16 or f32) with f32 accumulation; bias + tanh epilogue stays f32.
    """
    o_ref = refs[-1]
    h = x_ref[...]                              # already in matmul dtype (wrapper cast)
    for i in range(n_layers):
        w = refs[2 * i][...]
        b = refs[2 * i + 1][...]                # (1, P_{i+1}) f32 — broadcast over rows
        y = jnp.dot(h.astype(w.dtype), w, preferred_element_type=jnp.float32) + b
        if i < n_layers - 1:
            # Dropout(p=0.5) == identity in eval mode; tanh goes to the EUP slot.
            y = jnp.tanh(y)
        h = y
    o_ref[...] = h.astype(o_ref.dtype)


def mlp_forward(x, params, *, tile_b=None, matmul_dtype=jnp.bfloat16, vmem_frac=0.85):
    """Fused MLP forward. x: (B, s0) f32; params: list of (w:(s_i,s_{i+1}), b:(1,s_{i+1}))."""
    B, d_in = x.shape
    n_layers = len(params)
    sizes = [d_in] + [w.shape[1] for (w, _) in params]
    padded = [_round_up(s, _LANE) for s in sizes]

    w_item = jnp.dtype(matmul_dtype).itemsize
    out_item = jnp.dtype(x.dtype).itemsize

    # ---- VMEM accounting (per-generation budget; counts the default 2 pipeline
    # buffers per input and the in-kernel live activations) ----
    capacity = _vmem_capacity_bytes()
    budget = int(capacity * vmem_frac)        # ~54 MiB on v7x, ~109 MiB on v5e/v6e
    # Weights/biases: constant index_map (never re-fetched) but Pallas still allocates
    # 2 pipeline buffers per input by default -> count both.
    resident = 2 * sum(padded[i] * padded[i + 1] * w_item + padded[i + 1] * 4
                       for i in range(n_layers))
    # Per batch-tile row: double-buffered streamed input + output tiles, plus live f32
    # activations inside the kernel (current h + freshly produced y).
    per_row = (2 * (padded[0] * w_item + padded[-1] * out_item)
               + 2 * max(padded) * 4)

    if tile_b is None:
        avail = budget - resident
        # TODO(synk): layers whose (double-buffered) weights exceed the VMEM budget need a
        # streamed-weight fallback (memory_space=pl.ANY + pltpu.emit_pipeline over K/N tiles);
        # not emitted here — such configs will fail at compile time instead of degrading.
        tile_b = max(_SUBLANE, min(1024, avail // per_row)) if avail > 0 else _SUBLANE
    # Keep >= 2 batch tiles whenever the batch allows it: v7x shards "parallel" grid axes
    # across its two TensorCores (a 1-step grid idles one TC); harmless on v5e/v6e.
    two_tile_cap = _round_up(max(_SUBLANE, -(-B // 2)), _SUBLANE)
    tile_b = _round_up(max(_SUBLANE, min(int(tile_b), two_tile_cap)), _SUBLANE)
    bp_total = _round_up(max(B, tile_b), tile_b)

    # Zero-pad to lane/sublane-dense shapes (inert through matmul+bias+tanh, sliced off
    # below). bf16 path: cast x in the wrapper so the streamed tile is half the bytes
    # and no per-tile input cast runs in the kernel.
    xp = jnp.pad(x, ((0, bp_total - B), (0, padded[0] - d_in))).astype(matmul_dtype)
    flat_params = []
    for i, (w, b) in enumerate(params):
        wp = jnp.pad(w, ((0, padded[i] - w.shape[0]), (0, padded[i + 1] - w.shape[1])))
        bp = jnp.pad(b.reshape(1, -1), ((0, 0), (0, padded[i + 1] - b.shape[-1])))
        flat_params += [wp.astype(matmul_dtype), bp.astype(jnp.float32)]

    grid = (bp_total // tile_b,)
    in_specs = [pl.BlockSpec((tile_b, padded[0]), lambda i: (i, 0))]
    for li in range(n_layers):
        # Whole weight / bias as one block with a constant index_map -> stays VMEM-resident,
        # DMA'd once and never refetched across batch tiles.
        in_specs.append(pl.BlockSpec((padded[li], padded[li + 1]), lambda i: (0, 0)))
        in_specs.append(pl.BlockSpec((1, padded[li + 1]), lambda i: (0, 0)))
    out_spec = pl.BlockSpec((tile_b, padded[-1]), lambda i: (i, 0))

    vmem_limit = int(min(budget,
                         max(16 * 2**20, int(1.25 * (resident + tile_b * per_row)))))

    # Advisory cost estimate so XLA's scheduler can overlap the fused kernel.
    flops = 2 * bp_total * sum(padded[i] * padded[i + 1] for i in range(n_layers))
    transcendentals = bp_total * sum(padded[1:-1])
    bytes_accessed = (xp.size * xp.dtype.itemsize
                      + sum(p.size * p.dtype.itemsize for p in flat_params)
                      + bp_total * padded[-1] * out_item)

    out_padded = pl.pallas_call(
        functools.partial(_fused_mlp_kernel, n_layers=n_layers),
        out_shape=jax.ShapeDtypeStruct((bp_total, padded[-1]), x.dtype),
        grid_spec=pltpu.PrefetchScalarGridSpec(
            num_scalar_prefetch=0,
            grid=grid,
            in_specs=in_specs,
            out_specs=out_spec,
        ),
        compiler_params=pltpu.CompilerParams(
            dimension_semantics=("parallel",),   # batch tiles independent -> megacore split
            vmem_limit_bytes=vmem_limit,
        ),
        cost_estimate=pl.CostEstimate(
            flops=int(flops),
            transcendentals=int(transcendentals),
            bytes_accessed=int(bytes_accessed),
        ),
    )(xp, *flat_params)
    return out_padded[:B, :sizes[-1]]


def init_mlp_params(key, sizes, bias=True):
    """Deterministic init matching torch.nn.Linear default (U(-1/sqrt(in), 1/sqrt(in)))."""
    params = []
    for i in range(len(sizes) - 1):
        fan_in, fan_out = sizes[i], sizes[i + 1]
        key, kw, kb = jax.random.split(key, 3)
        bound = 1.0 / jnp.sqrt(jnp.float32(fan_in))
        w = jax.random.uniform(kw, (fan_in, fan_out), jnp.float32, -bound, bound)
        if bias:
            b = jax.random.uniform(kb, (1, fan_out), jnp.float32, -bound, bound)
        else:
            b = jnp.zeros((1, fan_out), jnp.float32)
        params.append((w, b))
    return params


if __name__ == "__main__":
    # MLP(sizes): Linear(32->64), Dropout(0.5), Tanh, Linear(64->16)
    sizes = (32, 64, 16)
    batch = 200   # deliberately not a tile multiple; wrapper pads rows and slices back

    key = jax.random.PRNGKey(0)
    key, kx = jax.random.split(key)
    x = jax.random.normal(kx, (batch, sizes[0]), jnp.float32)
    params = init_mlp_params(key, sizes, bias=True)

    # Pure-JAX reference (eval mode: dropout = identity).
    ref = x
    for i, (w, b) in enumerate(params):
        ref = ref @ w + b
        if i < len(params) - 1:
            ref = jnp.tanh(ref)

    # f32 matmul path (exact vs. reference).
    out_f32 = jax.block_until_ready(mlp_forward(x, params, matmul_dtype=jnp.float32))
    assert out_f32.shape == (batch, sizes[-1])
    assert jnp.allclose(out_f32, ref, atol=1e-4, rtol=1e-4)

    # Default path: bf16 matmul inputs (MXU-native on v5e/v6e/v7x), f32 accumulate +
    # f32 bias/tanh epilogue.
    out = jax.block_until_ready(mlp_forward(x, params))
    assert out.shape == (batch, sizes[-1])
    assert float(jnp.max(jnp.abs(out - ref))) < 0.1

    print("KERNEL_OK")
</pallas_src>

<mosaic_0001>
module attributes {stable_mosaic.version = 11 : i64} {
  func.func @_fused_mlp_kernel(%arg0: i32, %arg1: memref<104x128xf32, #tpu.memory_space<vmem>>, %arg2: memref<128x128xf32, #tpu.memory_space<vmem>>, %arg3: memref<1x128xf32, #tpu.memory_space<vmem>>, %arg4: memref<128x128xf32, #tpu.memory_space<vmem>>, %arg5: memref<1x128xf32, #tpu.memory_space<vmem>>, %arg6: memref<104x128xf32, #tpu.memory_space<vmem>>) attributes {dimension_semantics = [#tpu.dimension_semantics<parallel>], iteration_bounds = array<i64: 2>, scalar_prefetch = 0 : i64, scratch_operands = 0 : i64, tpu.core_type = #tpu.core_type<tc>, window_params = [{transform_indices = @transform_0, window_bounds = array<i64: 104, 128>}, {pipeline_mode = #tpu.pipeline_mode<synchronous>, transform_indices = @transform_1, window_bounds = array<i64: 128, 128>}, {pipeline_mode = #tpu.pipeline_mode<synchronous>, transform_indices = @transform_2, window_bounds = array<i64: 1, 128>}, {pipeline_mode = #tpu.pipeline_mode<synchronous>, transform_indices = @transform_3, window_bounds = array<i64: 128, 128>}, {pipeline_mode = #tpu.pipeline_mode<synchronous>, transform_indices = @transform_4, window_bounds = array<i64: 1, 128>}, {transform_indices = @transform_5, window_bounds = array<i64: 104, 128>}]} {
    %c0 = arith.constant 0 : index
    %c0_0 = arith.constant 0 : index
    %0 = vector.load %arg1[%c0, %c0_0] : memref<104x128xf32, #tpu.memory_space<vmem>>, vector<104x128xf32>
    %c0_1 = arith.constant 0 : index
    %c0_2 = arith.constant 0 : index
    %1 = vector.load %arg2[%c0_1, %c0_2] : memref<128x128xf32, #tpu.memory_space<vmem>>, vector<128x128xf32>
    %c0_3 = arith.constant 0 : index
    %c0_4 = arith.constant 0 : index
    %2 = vector.load %arg3[%c0_3, %c0_4] : memref<1x128xf32, #tpu.memory_space<vmem>>, vector<1x128xf32>
    %cst = arith.constant dense<0.000000e+00> : vector<104x128xf32>
    %3 = tpu.matmul %0, %1, %cst {dimension_numbers = #tpu.dot_dimension_numbers<[1], [0], [0], [1], [0, 0, 1, 1], [], []>} : vector<104x128xf32>, vector<128x128xf32>, vector<104x128xf32> -> vector<104x128xf32>
    %4 = vector.broadcast %2 : vector<1x128xf32> to vector<104x128xf32>
    %5 = arith.addf %3, %4 : vector<104x128xf32>
    %6 = math.tanh %5 : vector<104x128xf32>
    %c0_5 = arith.constant 0 : index
    %c0_6 = arith.constant 0 : index
    %7 = vector.load %arg4[%c0_5, %c0_6] : memref<128x128xf32, #tpu.memory_space<vmem>>, vector<128x128xf32>
    %c0_7 = arith.constant 0 : index
    %c0_8 = arith.constant 0 : index
    %8 = vector.load %arg5[%c0_7, %c0_8] : memref<1x128xf32, #tpu.memory_space<vmem>>, vector<1x128xf32>
    %cst_9 = arith.constant dense<0.000000e+00> : vector<104x128xf32>
    %9 = tpu.matmul %6, %7, %cst_9 {dimension_numbers = #tpu.dot_dimension_numbers<[1], [0], [0], [1], [0, 0, 1, 1], [], []>} : vector<104x128xf32>, vector<128x128xf32>, vector<104x128xf32> -> vector<104x128xf32>
    %10 = vector.broadcast %8 : vector<1x128xf32> to vector<104x128xf32>
    %11 = arith.addf %9, %10 : vector<104x128xf32>
    %c0_10 = arith.constant 0 : index
    %c0_11 = arith.constant 0 : index
    %12 = vector.load %arg6[%c0_10, %c0_11] : memref<104x128xf32, #tpu.memory_space<vmem>>, vector<104x128xf32>
    tpu.vector_store %arg6[%c0_10, %c0_11], %11 {strides = array<i32>} : memref<104x128xf32, #tpu.memory_space<vmem>>, vector<104x128xf32>,
    return
  }
  func.func @transform_0(%arg0: i32) -> (i32, i32) {
    %c0_i32 = arith.constant 0 : i32
    %c0_i32_0 = arith.constant 0 : i32
    return %arg0, %c0_i32 : i32, i32
  }
  func.func @transform_1(%arg0: i32) -> (i32, i32) {
    %c0_i32 = arith.constant 0 : i32
    %c0_i32_0 = arith.constant 0 : i32
    %c0_i32_1 = arith.constant 0 : i32
    return %c0_i32, %c0_i32_0 : i32, i32
  }
  func.func @transform_2(%arg0: i32) -> (i32, i32) {
    %c0_i32 = arith.constant 0 : i32
    %c0_i32_0 = arith.constant 0 : i32
    %c0_i32_1 = arith.constant 0 : i32
    return %c0_i32, %c0_i32_0 : i32, i32
  }
  func.func @transform_3(%arg0: i32) -> (i32, i32) {
    %c0_i32 = arith.constant 0 : i32
    %c0_i32_0 = arith.constant 0 : i32
    %c0_i32_1 = arith.constant 0 : i32
    return %c0_i32, %c0_i32_0 : i32, i32
  }
  func.func @transform_4(%arg0: i32) -> (i32, i32) {
    %c0_i32 = arith.constant 0 : i32
    %c0_i32_0 = arith.constant 0 : i32
    %c0_i32_1 = arith.constant 0 : i32
    return %c0_i32, %c0_i32_0 : i32, i32
  }
  func.func @transform_5(%arg0: i32) -> (i32, i32) {
    %c0_i32 = arith.constant 0 : i32
    %c0_i32_0 = arith.constant 0 : i32
    return %arg0, %c0_i32 : i32, i32
  }
}

</mosaic_0001>

<llo_original>
// kernel: tpu_custom_call.1
$region0: #{tpu_custom_call.1}
  #allocation0 [shape = 'u32[]', space=smem, size = 0x4, offset = 0x4, fixed_abs, tag = 'smem constant byte address 0x4 - core index']
  #allocation1 [shape = 'u32[72,128]{1,0:T(1,128)}', space=vmem, size = 0x9000, scoped, tag = 'internal scratch']
  %s0 = inlined_call_operand.hbm [shape: f32[208,128], index: 0, kind: input, shape index: {}]
  %s1 = inlined_call_operand.hbm [shape: f32[128,128], index: 1, kind: input, shape index: {}]
  %s2 = inlined_call_operand.vmem [shape: f32[1,128], index: 2, kind: input, shape index: {}]
  %s3 = inlined_call_operand.hbm [shape: f32[128,128], index: 3, kind: input, shape index: {}]
  %s4 = inlined_call_operand.vmem [shape: f32[1,128], index: 4, kind: input, shape index: {}]
  %s5 = inlined_call_operand.hbm [shape: f32[208,128], index: 5, kind: output, shape index: {}]
  %s6 = sld [smem:[#allocation0]]
  $region65: #{tpu_custom_call.1} parent=0
    _
  %s8 = ssub.s32 1, %s6
  %s9 = scalar_select 0, %s8, %s6
  $region1: #{tpu_custom_call.1} parent=0
    #allocation2 [shape = 'u8[106496]{0}', space=vmem, size = 0x1a000, scoped, tag = 'input window, operand 0']
    #allocation3 [shape = 's32[2]{0}', space=sflag, size = 0x8, scoped, tag = 'scoped memory for tpu_custom_call.1']
    #allocation4 [shape = 's32[2]{0}', space=sflag, size = 0x8, scoped, tag = 'scoped memory for tpu_custom_call.1']
    #allocation5 [shape = 'u8[65536]{0}', space=vmem, size = 0x10000, scoped, tag = 'input window, operand 1, single buffered']
    #allocation6 [shape = 's32[1]{0}', space=sflag, size = 0x4, scoped, tag = 'scoped memory for tpu_custom_call.1']
    #allocation7 [shape = 'u8[65536]{0}', space=vmem, size = 0x10000, scoped, tag = 'input window, operand 3, single buffered']
    #allocation8 [shape = 'u8[106496]{0}', space=vmem, size = 0x1a000, scoped, tag = 'output window, operand 0']
    %10 = vsyncpa [#allocation3], 0
    %s11 = scalar_lea.sflag [#allocation3], 1
    %12 = vsyncpa %s11, 0
    %13 = vsyncpa [#allocation6], 0
    %14 = vsyncpa [#allocation4], 0
    %s15 = scalar_lea.sflag [#allocation4], 1
    %16 = vsyncpa %s15, 0
    loop: start=0, step=1, limit=4
    $region2: #{tpu_custom_call.1} parent=1 // loop_pre_header
      _
    $region3: #{tpu_custom_call.1} parent=1 // loop_header
      %s18 = sphi 0, %s22
      %p19 = scmp.ge.s32.totalorder %s18, 4
      %s28 = sphi 0, %s30
      %s31 = sphi 0, %s28
      %s32 = sphi 0, %s31
      %s48 = sphi 0, %s32
      %s52 = sphi 0, %s52
      %s54 = sphi 0, %s52
      %s55 = sphi 0, %s54
      %s69 = sphi 0, %s55
      %s73 = sphi 0, %s73
      %s75 = sphi 0, %s73
      %s76 = sphi 0, %s75
      %s90 = sphi 0, %s76
      %s94 = sphi 0, %s94
      %s96 = sphi 0, %s94
      %s97 = sphi 0, %s96
      %s111 = sphi 0, %s97
      %s115 = sphi 0, %s115
      %s117 = sphi 0, %s115
      %s118 = sphi 0, %s117
      %s132 = sphi 0, %s118
      %s138 = sphi 0, %s140
      %s141 = sphi 0, %s138
      %s142 = sphi 0, %s141
      %s158 = sphi 0, %s142
    $region4: #{tpu_custom_call.1} parent=1 // loop_header_branch
      %21 = sbr.rel (%p19) target = $region8
    $region5: #{tpu_custom_call.1} parent=1 // loop_body
      %s23 = ssub.s32 %s18, 1
      %s24 = ssub.s32 %s18, 2
      %s25 = sadd.s32 %s18, 1
      %s26 = ssub.s32 %s18, %s25
      %p27 = scmp.eq.s32.totalorder %s26, 0
      %s29 = sadd.s32 %s28, 1
      %s30 = scalar_select %p27, %s28, %s29
      %p33 = pneg %p27
      %p34 = scmp.eq.s32.totalorder %s18, 1
      %p35 = por %p33, %p34
      %p36 = scmp.ne.s32.totalorder %s28, %s31
      %p37 = scmp.eq.s32.totalorder %s18, 0
      %p38 = por %p36, %p37
      %p39 = scmp.ne.s32.totalorder %s28, %s31
      %p40 = scmp.eq.s32.totalorder %s23, 1
      %p41 = por %p39, %p40
      %p42 = scmp.ne.s32.totalorder %s31, %s32
      %p43 = scmp.eq.s32.totalorder %s23, 0
      %p44 = por %p42, %p43
      %p45 = scmp.ne.s32.totalorder %s31, %s32
      %p46 = scmp.eq.s32.totalorder %s24, 1
      %p47 = por %p45, %p46
      %p49 = scmp.ne.s32.totalorder %s32, %s48
      %p50 = scmp.eq.s32.totalorder %s24, 0
      %p51 = por %p49, %p50
      %s53 = sadd.s32 %s52, 1
      %p56 = scmp.eq.s32.totalorder %s18, 1
      %p57 = scmp.ne.s32.totalorder %s52, %s54
      %p58 = scmp.eq.s32.totalorder %s18, 0
      %p59 = por %p57, %p58
      %p60 = scmp.ne.s32.totalorder %s52, %s54
      %p61 = scmp.eq.s32.totalorder %s23, 1
      %p62 = por %p60, %p61
      %p63 = scmp.ne.s32.totalorder %s54, %s55
      %p64 = scmp.eq.s32.totalorder %s23, 0
      %p65 = por %p63, %p64
      %p66 = scmp.ne.s32.totalorder %s54, %s55
      %p67 = scmp.eq.s32.totalorder %s24, 1
      %p68 = por %p66, %p67
      %p70 = scmp.ne.s32.totalorder %s55, %s69
      %p71 = scmp.eq.s32.totalorder %s24, 0
      %p72 = por %p70, %p71
      %s74 = sadd.s32 %s73, 1
      %p77 = scmp.eq.s32.totalorder %s18, 1
      %p78 = scmp.ne.s32.totalorder %s73, %s75
      %p79 = scmp.eq.s32.totalorder %s18, 0
      %p80 = por %p78, %p79
      %p81 = scmp.ne.s32.totalorder %s73, %s75
      %p82 = scmp.eq.s32.totalorder %s23, 1
      %p83 = por %p81, %p82
      %p84 = scmp.ne.s32.totalorder %s75, %s76
      %p85 = scmp.eq.s32.totalorder %s23, 0
      %p86 = por %p84, %p85
      %p87 = scmp.ne.s32.totalorder %s75, %s76
      %p88 = scmp.eq.s32.totalorder %s24, 1
      %p89 = por %p87, %p88
      %p91 = scmp.ne.s32.totalorder %s76, %s90
      %p92 = scmp.eq.s32.totalorder %s24, 0
      %p93 = por %p91, %p92
      %s95 = sadd.s32 %s94, 1
      %p98 = scmp.eq.s32.totalorder %s18, 1
      %p99 = scmp.ne.s32.totalorder %s94, %s96
      %p100 = scmp.eq.s32.totalorder %s18, 0
      %p101 = por %p99, %p100
      %p102 = scmp.ne.s32.totalorder %s94, %s96
      %p103 = scmp.eq.s32.totalorder %s23, 1
      %p104 = por %p102, %p103
      %p105 = scmp.ne.s32.totalorder %s96, %s97
      %p106 = scmp.eq.s32.totalorder %s23, 0
      %p107 = por %p105, %p106
      %p108 = scmp.ne.s32.totalorder %s96, %s97
      %p109 = scmp.eq.s32.totalorder %s24, 1
      %p110 = por %p108, %p109
      %p112 = scmp.ne.s32.totalorder %s97, %s111
      %p113 = scmp.eq.s32.totalorder %s24, 0
      %p114 = por %p112, %p113
      %s116 = sadd.s32 %s115, 1
      %p119 = scmp.eq.s32.totalorder %s18, 1
      %p120 = scmp.ne.s32.totalorder %s115, %s117
      %p121 = scmp.eq.s32.totalorder %s18, 0
      %p122 = por %p120, %p121
      %p123 = scmp.ne.s32.totalorder %s115, %s117
      %p124 = scmp.eq.s32.totalorder %s23, 1
      %p125 = por %p123, %p124
      %p126 = scmp.ne.s32.totalorder %s117, %s118
      %p127 = scmp.eq.s32.totalorder %s23, 0
      %p128 = por %p126, %p127
      %p129 = scmp.ne.s32.totalorder %s117, %s118
      %p130 = scmp.eq.s32.totalorder %s24, 1
      %p131 = por %p129, %p130
      %p133 = scmp.ne.s32.totalorder %s118, %s132
      %p134 = scmp.eq.s32.totalorder %s24, 0
      %p135 = por %p133, %p134
      %s136 = ssub.s32 %s18, %s25
      %p137 = scmp.eq.s32.totalorder %s136, 0
      %s139 = sadd.s32 %s138, 1
      %s140 = scalar_select %p137, %s138, %s139
      %p143 = pneg %p137
      %p144 = scmp.eq.s32.totalorder %s18, 1
      %p145 = por %p143, %p144
      %p146 = scmp.ne.s32.totalorder %s138, %s141
      %p147 = scmp.eq.s32.totalorder %s18, 0
      %p148 = por %p146, %p147
      %p149 = scmp.ne.s32.totalorder %s138, %s141
      %p150 = scmp.eq.s32.totalorder %s23, 1
      %p151 = por %p149, %p150
      %p152 = scmp.ne.s32.totalorder %s141, %s142
      %p153 = scmp.eq.s32.totalorder %s23, 0
      %p154 = por %p152, %p153
      %p155 = scmp.ne.s32.totalorder %s141, %s142
      %p156 = scmp.eq.s32.totalorder %s24, 1
      %p157 = por %p155, %p156
      %p159 = scmp.ne.s32.totalorder %s142, %s158
      %p160 = scmp.eq.s32.totalorder %s24, 0
      %p161 = por %p159, %p160
      %p162 = scmp.le.s32.totalorder 1, %s18
      %p163 = scmp.lt.s32.totalorder %s18, 3
      %p164 = pnand %p162, %p163
      %p165 = pneg %p164
      // Predicated region
      $region9: #{tpu_custom_call.1} parent=5 // pred_check
        _
      $region10: #{tpu_custom_call.1} parent=5 // pred_check_branch
        %167 = sbr.rel (%p164) target = $region12
      $region11: #{tpu_custom_call.1} parent=5 // pred_region
        %s168 = ssub.s32 %s18, 1
        // Predicated region
        $region13: #{tpu_custom_call.1} parent=11 // pred_check
          %p169 = pneg %p65
        $region14: #{tpu_custom_call.1} parent=11 // pred_check_branch
          %171 = sbr.rel (%p169) target = $region16
        $region15: #{tpu_custom_call.1} parent=11 // pred_region
          %173 = vsyncadd [#allocation6], 0
          %s174 = sshll.u32 %s1, 4
          %s175 = int_to_ptr.hbm [resolvable:$true] %s174
          %s176 = sshll.u32 [#allocation5], 4
          %s177 = int_to_ptr.vmem [resolvable:$true] %s176
          %182 = dma.hbm_to_vmem [thread:$0]  %s175, 2048, %s177, [#allocation6], 128, 128, 8
        $region16: #{tpu_custom_call.1} parent=11 // pred_fallthru
          _
        // Predicated region
        $region17: #{tpu_custom_call.1} parent=11 // pred_check
          %p183 = pneg %p86
        $region18: #{tpu_custom_call.1} parent=11 // pred_check_branch
          %185 = sbr.rel (%p183) target = $region20
        $region19: #{tpu_custom_call.1} parent=11 // pred_region
          _
        $region20: #{tpu_custom_call.1} parent=11 // pred_fallthru
          _
        // Predicated region
        $region21: #{tpu_custom_call.1} parent=11 // pred_check
          %p186 = pneg %p107
        $region22: #{tpu_custom_call.1} parent=11 // pred_check_branch
          %188 = sbr.rel (%p186) target = $region24
        $region23: #{tpu_custom_call.1} parent=11 // pred_region
          %190 = vsyncadd [#allocation6], 0
          %s191 = sshll.u32 %s3, 4
          %s192 = int_to_ptr.hbm [resolvable:$true] %s191
          %s193 = sshll.u32 [#allocation7], 4
          %s194 = int_to_ptr.vmem [resolvable:$true] %s193
          %199 = dma.hbm_to_vmem [thread:$0]  %s192, 2048, %s194, [#allocation6], 128, 128, 8
        $region24: #{tpu_custom_call.1} parent=11 // pred_fallthru
          _
        // Predicated region
        $region25: #{tpu_custom_call.1} parent=11 // pred_check
          %p200 = pneg %p128
        $region26: #{tpu_custom_call.1} parent=11 // pred_check_branch
          %202 = sbr.rel (%p200) target = $region28
        $region27: #{tpu_custom_call.1} parent=11 // pred_region
          _
        $region28: #{tpu_custom_call.1} parent=11 // pred_fallthru
          _
      $region12: #{tpu_custom_call.1} parent=5 // pred_fallthru
        _
      %p203 = scmp.lt.s32.totalorder %s18, 2
      // Predicated region
      $region29: #{tpu_custom_call.1} parent=5 // pred_check
        %p204 = pneg %p203
      $region30: #{tpu_custom_call.1} parent=5 // pred_check_branch
        %206 = sbr.rel (%p204) target = $region32
      $region31: #{tpu_custom_call.1} parent=5 // pred_region
        // Predicated region
        $region33: #{tpu_custom_call.1} parent=31 // pred_check
          %p207 = pneg %p38
        $region34: #{tpu_custom_call.1} parent=31 // pred_check_branch
          %209 = sbr.rel (%p207) target = $region36
        $region35: #{tpu_custom_call.1} parent=31 // pred_region
          %s210 = sand.u32 %s28, 1
          %s211 = scalar_lea.sflag [#allocation3], %s210
          %s212 = sand.u32 %s28, 1
          %s213 = smul.addr %s212, 104
          %s214 = scalar_lea.vmem [#allocation2], %s213
          %s215 = smul.u32 13, %s18
          %217 = vsyncadd %s211, 0
          %s218 = smul.addr %s215, 8
          %s219 = scalar_lea.hbm %s0, %s218
          %s220 = sshll.u32 %s219, 4
          %s221 = int_to_ptr.hbm [resolvable:$true] %s220
          %s222 = sshll.u32 %s214, 4
          %s223 = int_to_ptr.vmem [resolvable:$true] %s222
          %228 = dma.hbm_to_vmem [thread:$0]  %s221, 1664, %s223, %s211, 128, 128, 8
        $region36: #{tpu_custom_call.1} parent=31 // pred_fallthru
          _
      $region32: #{tpu_custom_call.1} parent=5 // pred_fallthru
        _
      %p229 = scmp.le.s32.totalorder 1, %s18
      %p230 = scmp.lt.s32.totalorder %s18, 3
      %p231 = pnand %p229, %p230
      %p232 = pneg %p231
      // Predicated region
      $region37: #{tpu_custom_call.1} parent=5 // pred_check
        _
      $region38: #{tpu_custom_call.1} parent=5 // pred_check_branch
        %234 = sbr.rel (%p231) target = $region40
      $region39: #{tpu_custom_call.1} parent=5 // pred_region
        %s235 = ssub.s32 %s18, 1
        %s236 = sand.u32 %s31, 1
        %s237 = scalar_lea.sflag [#allocation3], %s236
        %s238 = sand.u32 %s31, 1
        %s239 = smul.addr %s238, 104
        %s240 = scalar_lea.vmem [#allocation2], %s239
        // Predicated region
        $region41: #{tpu_custom_call.1} parent=39 // pred_check
          %p241 = pneg %p44
        $region42: #{tpu_custom_call.1} parent=39 // pred_check_branch
          %243 = sbr.rel (%p241) target = $region44
        $region43: #{tpu_custom_call.1} parent=39 // pred_region
          %245 = dma.done %s237, 1664
        $region44: #{tpu_custom_call.1} parent=39 // pred_fallthru
          _
        // Predicated region
        $region45: #{tpu_custom_call.1} parent=39 // pred_check
          %p246 = pneg %p65
        $region46: #{tpu_custom_call.1} parent=39 // pred_check_branch
          %248 = sbr.rel (%p246) target = $region48
        $region47: #{tpu_custom_call.1} parent=39 // pred_region
          %250 = dma.done [#allocation6], 2048
        $region48: #{tpu_custom_call.1} parent=39 // pred_fallthru
          _
        // Predicated region
        $region49: #{tpu_custom_call.1} parent=39 // pred_check
          %p251 = pneg %p107
        $region50: #{tpu_custom_call.1} parent=39 // pred_check_branch
          %253 = sbr.rel (%p251) target = $region52
        $region51: #{tpu_custom_call.1} parent=39 // pred_region
          %255 = dma.done [#allocation6], 2048
        $region52: #{tpu_custom_call.1} parent=39 // pred_fallthru
          _
        %s256 = sand.u32 %s31, 1
        %s257 = scalar_lea.sflag [#allocation3], %s256
        %s258 = sand.u32 %s31, 1
        %s259 = smul.addr %s258, 104
        %s260 = scalar_lea.vmem [#allocation2], %s259
        %p261 = pneg %p44
        %p262 = pneg %p41
        %p263 = pneg %p65
        %p264 = pneg %p62
        %p265 = pneg %p86
        %p266 = pneg %p83
        %p267 = pneg %p107
        %p268 = pneg %p104
        %p269 = pneg %p128
        %p270 = pneg %p125
        %p271 = pneg %p154
        %p272 = pneg %p151
        %s273 = sand.u32 %s141, 1
        %s274 = scalar_lea.sflag [#allocation4], %s273
        %s275 = sand.u32 %s141, 1
        %s276 = smul.addr %s275, 104
        %s277 = scalar_lea.vmem [#allocation8], %s276
        %s278 = smul.u32 13, %s23
        %s279 = smul.u32 13, %s23
        %v280 = vld [vmem:[%s240] sm:$0xff]
        %v281 = vld [vmem:[%s240 + $0x8] sm:$0xff]
        %v282 = vld [vmem:[%s240 + $0x10] sm:$0xff]
        %v283 = vld [vmem:[%s240 + $0x18] sm:$0xff]
        %v284 = vld [vmem:[%s240 + $0x20] sm:$0xff]
        %v285 = vld [vmem:[%s240 + $0x28] sm:$0xff]
        %v286 = vld [vmem:[%s240 + $0x30] sm:$0xff]
        %v287 = vld [vmem:[%s240 + $0x38] sm:$0xff]
        %v288 = vld [vmem:[%s240 + $0x40] sm:$0xff]
        %v289 = vld [vmem:[%s240 + $0x48] sm:$0xff]
        %v290 = vld [vmem:[%s240 + $0x50] sm:$0xff]
        %v291 = vld [vmem:[%s240 + $0x58] sm:$0xff]
        %v292 = vld [vmem:[%s240 + $0x60] sm:$0xff]
        %v293 = vld [vmem:[#allocation5] sm:$0xff]
        %v294 = vld [vmem:[#allocation5 + $0x8] sm:$0xff]
        %v295 = vld [vmem:[#allocation5 + $0x10] sm:$0xff]
        %v296 = vld [vmem:[#allocation5 + $0x18] sm:$0xff]
        %v297 = vld [vmem:[#allocation5 + $0x20] sm:$0xff]
        %v298 = vld [vmem:[#allocation5 + $0x28] sm:$0xff]
        %v299 = vld [vmem:[#allocation5 + $0x30] sm:$0xff]
        %v300 = vld [vmem:[#allocation5 + $0x38] sm:$0xff]
        %v301 = vld [vmem:[#allocation5 + $0x40] sm:$0xff]
        %v302 = vld [vmem:[#allocation5 + $0x48] sm:$0xff]
        %v303 = vld [vmem:[#allocation5 + $0x50] sm:$0xff]
        %v304 = vld [vmem:[#allocation5 + $0x58] sm:$0xff]
        %v305 = vld [vmem:[#allocation5 + $0x60] sm:$0xff]
        %v306 = vld [vmem:[#allocation5 + $0x68] sm:$0xff]
        %v307 = vld [vmem:[#allocation5 + $0x70] sm:$0xff]
        %v308 = vld [vmem:[#allocation5 + $0x78] sm:$0xff]
        %v309 = vld [vmem:[%s2] sm:$0x1]
        %v311 = vperm.slane %v309, 0
        %313 = vmatpush.msra.mxu0 %v308
        %314 = vmatpush.msra.mxu0 %v307
        %315 = vmatpush.msra.mxu0 %v306
        %316 = vmatpush.msra.mxu0 %v305
        %317 = vmatpush.msra.mxu0 %v304
        %318 = vmatpush.msra.mxu0 %v303
        %319 = vmatpush.msra.mxu0 %v302
        %320 = vmatpush.msra.mxu0 %v301
        %321 = vmatpush.msra.mxu0 %v300
        %322 = vmatpush.msra.mxu0 %v299
        %323 = vmatpush.msra.mxu0 %v298
        %324 = vmatpush.msra.mxu0 %v297
        %325 = vmatpush.msra.mxu0 %v296
        %326 = vmatpush.msra.mxu0 %v295
        %327 = vmatpush.msra.mxu0 %v294
        %328 = vmatpush.msra.mxu0 %v293
        %329 = vmatmul.f32.gmra.mxu0 %v280
        %v330 = vpop.f32.mrf.mxu0
        %v331 = vadd.f32 %v311, %v330
        %332 = vmatmul.f32.gmra.mxu0 %v281
        %v333 = vpop.f32.mrf.mxu0
        %v334 = vadd.f32 %v311, %v333
        %335 = vmatmul.f32.gmra.mxu0 %v282
        %v336 = vpop.f32.mrf.mxu0
        %v337 = vadd.f32 %v311, %v336
        %338 = vmatmul.f32.gmra.mxu0 %v283
        %v339 = vpop.f32.mrf.mxu0
        %v340 = vadd.f32 %v311, %v339
        %341 = vmatmul.f32.gmra.mxu0 %v284
        %v342 = vpop.f32.mrf.mxu0
        %v343 = vadd.f32 %v311, %v342
        %344 = vmatmul.f32.gmra.mxu0 %v285
        %v345 = vpop.f32.mrf.mxu0
        %v346 = vadd.f32 %v311, %v345
        %347 = vmatmul.f32.gmra.mxu0 %v286
        %v348 = vpop.f32.mrf.mxu0
        %v349 = vadd.f32 %v311, %v348
        %350 = vmatmul.f32.gmra.mxu0 %v287
        %v351 = vpop.f32.mrf.mxu0
        %v352 = vadd.f32 %v311, %v351
        %353 = vmatmul.f32.gmra.mxu0 %v288
        %v354 = vpop.f32.mrf.mxu0
        %v355 = vadd.f32 %v311, %v354
        %356 = vmatmul.f32.gmra.mxu0 %v289
        %v357 = vpop.f32.mrf.mxu0
        %v358 = vadd.f32 %v311, %v357
        %359 = vmatmul.f32.gmra.mxu0 %v290
        %v360 = vpop.f32.mrf.mxu0
        %v361 = vadd.f32 %v311, %v360
        %362 = vmatmul.f32.gmra.mxu0 %v291
        %v363 = vpop.f32.mrf.mxu0
        %v364 = vadd.f32 %v311, %v363
        %365 = vmatmul.f32.gmra.mxu0 %v292
        %v366 = vpop.f32.mrf.mxu0
        %v367 = vadd.f32 %v311, %v366
        %368 = vdwg.mxu0
        %v369 = vtanh.pop %v331
        %v370 = vtanh.pop %v334
        %v371 = vtanh.pop %v337
        %v372 = vtanh.pop %v340
        %v373 = vtanh.pop %v343
        %v374 = vtanh.pop %v346
        %v375 = vtanh.pop %v349
        %v376 = vtanh.pop %v352
        %v377 = vtanh.pop %v355
        %v378 = vtanh.pop %v358
        %v379 = vtanh.pop %v361
        %v380 = vtanh.pop %v364
        %v381 = vtanh.pop %v367
        %v382 = vld [vmem:[#allocation7] sm:$0xff]
        %v383 = vld [vmem:[#allocation7 + $0x8] sm:$0xff]
        %v384 = vld [vmem:[#allocation7 + $0x10] sm:$0xff]
        %v385 = vld [vmem:[#allocation7 + $0x18] sm:$0xff]
        %v386 = vld [vmem:[#allocation7 + $0x20] sm:$0xff]
        %v387 = vld [vmem:[#allocation7 + $0x28] sm:$0xff]
        %v388 = vld [vmem:[#allocation7 + $0x30] sm:$0xff]
        %v389 = vld [vmem:[#allocation7 + $0x38] sm:$0xff]
        %v390 = vld [vmem:[#allocation7 + $0x40] sm:$0xff]
        %v391 = vld [vmem:[#allocation7 + $0x48] sm:$0xff]
        %v392 = vld [vmem:[#allocation7 + $0x50] sm:$0xff]
        %v393 = vld [vmem:[#allocation7 + $0x58] sm:$0xff]
        %v394 = vld [vmem:[#allocation7 + $0x60] sm:$0xff]
        %v395 = vld [vmem:[#allocation7 + $0x68] sm:$0xff]
        %v396 = vld [vmem:[#allocation7 + $0x70] sm:$0xff]
        %v397 = vld [vmem:[#allocation7 + $0x78] sm:$0xff]
        %v398 = vld [vmem:[%s4] sm:$0x1]
        %v400 = vperm.slane %v398, 0
        %402 = vmatpush.msra.mxu0 %v397
        %403 = vmatpush.msra.mxu0 %v396
        %404 = vmatpush.msra.mxu0 %v395
        %405 = vmatpush.msra.mxu0 %v394
        %406 = vmatpush.msra.mxu0 %v393
        %407 = vmatpush.msra.mxu0 %v392
        %408 = vmatpush.msra.mxu0 %v391
        %409 = vmatpush.msra.mxu0 %v390
        %410 = vmatpush.msra.mxu0 %v389
        %411 = vmatpush.msra.mxu0 %v388
        %412 = vmatpush.msra.mxu0 %v387
        %413 = vmatpush.msra.mxu0 %v386
        %414 = vmatpush.msra.mxu0 %v385
        %415 = vmatpush.msra.mxu0 %v384
        %416 = vmatpush.msra.mxu0 %v383
        %417 = vmatpush.msra.mxu0 %v382
        %418 = vmatmul.f32.gmra.mxu0 %v369
        %v419 = vpop.f32.mrf.mxu0
        %v420 = vadd.f32 %v400, %v419
        %421 = vmatmul.f32.gmra.mxu0 %v370
        %v422 = vpop.f32.mrf.mxu0
        %v423 = vadd.f32 %v400, %v422
        %424 = vmatmul.f32.gmra.mxu0 %v371
        %v425 = vpop.f32.mrf.mxu0
        %v426 = vadd.f32 %v400, %v425
        %427 = vmatmul.f32.gmra.mxu0 %v372
        %v428 = vpop.f32.mrf.mxu0
        %v429 = vadd.f32 %v400, %v428
        %430 = vmatmul.f32.gmra.mxu0 %v373
        %v431 = vpop.f32.mrf.mxu0
        %v432 = vadd.f32 %v400, %v431
        %433 = vmatmul.f32.gmra.mxu0 %v374
        %v434 = vpop.f32.mrf.mxu0
        %v435 = vadd.f32 %v400, %v434
        %436 = vmatmul.f32.gmra.mxu0 %v375
        %v437 = vpop.f32.mrf.mxu0
        %v438 = vadd.f32 %v400, %v437
        %439 = vmatmul.f32.gmra.mxu0 %v376
        %v440 = vpop.f32.mrf.mxu0
        %v441 = vadd.f32 %v400, %v440
        %442 = vmatmul.f32.gmra.mxu0 %v377
        %v443 = vpop.f32.mrf.mxu0
        %v444 = vadd.f32 %v400, %v443
        %445 = vmatmul.f32.gmra.mxu0 %v378
        %v446 = vpop.f32.mrf.mxu0
        %v447 = vadd.f32 %v400, %v446
        %448 = vmatmul.f32.gmra.mxu0 %v379
        %v449 = vpop.f32.mrf.mxu0
        %v450 = vadd.f32 %v400, %v449
        %451 = vmatmul.f32.gmra.mxu0 %v380
        %v452 = vpop.f32.mrf.mxu0
        %v453 = vadd.f32 %v400, %v452
        %454 = vmatmul.f32.gmra.mxu0 %v381
        %v455 = vpop.f32.mrf.mxu0
        %v456 = vadd.f32 %v400, %v455
        %457 = vdwg.mxu0
        %458 = vst [vmem:[%s277] sm:$0xff] %v420
        %459 = vst [vmem:[%s277 + $0x8] sm:$0xff] %v423
        %460 = vst [vmem:[%s277 + $0x10] sm:$0xff] %v426
        %461 = vst [vmem:[%s277 + $0x18] sm:$0xff] %v429
        %462 = vst [vmem:[%s277 + $0x20] sm:$0xff] %v432
        %463 = vst [vmem:[%s277 + $0x28] sm:$0xff] %v435
        %464 = vst [vmem:[%s277 + $0x30] sm:$0xff] %v438
        %465 = vst [vmem:[%s277 + $0x38] sm:$0xff] %v441
        %466 = vst [vmem:[%s277 + $0x40] sm:$0xff] %v444
        %467 = vst [vmem:[%s277 + $0x48] sm:$0xff] %v447
        %468 = vst [vmem:[%s277 + $0x50] sm:$0xff] %v450
        %469 = vst [vmem:[%s277 + $0x58] sm:$0xff] %v453
        %470 = vst [vmem:[%s277 + $0x60] sm:$0xff] %v456
        %s471 = sand.u32 %s141, 1
        %s472 = scalar_lea.sflag [#allocation4], %s471
        %s473 = sand.u32 %s141, 1
        %s474 = smul.addr %s473, 104
        %s475 = scalar_lea.vmem [#allocation8], %s474
        // Predicated region
        $region53: #{tpu_custom_call.1} parent=39 // pred_check
          %p476 = pneg %p151
        $region54: #{tpu_custom_call.1} parent=39 // pred_check_branch
          %478 = sbr.rel (%p476) target = $region56
        $region55: #{tpu_custom_call.1} parent=39 // pred_region
          %s479 = smul.u32 13, %s23
          %481 = vsyncadd %s472, 0
          %s482 = smul.addr %s479, 8
          %s483 = scalar_lea.hbm %s5, %s482
          %s484 = sshll.u32 %s475, 4
          %s485 = int_to_ptr.vmem [resolvable:$true] %s484
          %s486 = sshll.u32 %s483, 4
          %s487 = int_to_ptr.hbm [resolvable:$true] %s486
          %492 = dma.vmem_to_hbm [thread:$0]  %s485, 1664, %s487, %s472, 128, 128, 8
        $region56: #{tpu_custom_call.1} parent=39 // pred_fallthru
          _
      $region40: #{tpu_custom_call.1} parent=5 // pred_fallthru
        _
      %p493 = scmp.le.s32.totalorder 2, %s18
      // Predicated region
      $region57: #{tpu_custom_call.1} parent=5 // pred_check
        %p494 = pneg %p493
      $region58: #{tpu_custom_call.1} parent=5 // pred_check_branch
        %496 = sbr.rel (%p494) target = $region60
      $region59: #{tpu_custom_call.1} parent=5 // pred_region
        %s497 = ssub.s32 %s18, 2
        // Predicated region
        $region61: #{tpu_custom_call.1} parent=59 // pred_check
          %p498 = pneg %p157
        $region62: #{tpu_custom_call.1} parent=59 // pred_check_branch
          %500 = sbr.rel (%p498) target = $region64
        $region63: #{tpu_custom_call.1} parent=59 // pred_region
          %s501 = sand.u32 %s142, 1
          %s502 = scalar_lea.sflag [#allocation4], %s501
          %s503 = sand.u32 %s142, 1
          %s504 = smul.addr %s503, 104
          %s505 = scalar_lea.vmem [#allocation8], %s504
          %507 = dma.done %s502, 1664
        $region64: #{tpu_custom_call.1} parent=59 // pred_fallthru
          _
      $region60: #{tpu_custom_call.1} parent=5 // pred_fallthru
        _
    $region6: #{tpu_custom_call.1} parent=1 // loop_footer
      %s22 = sadd.s32 1, %s18
    $region7: #{tpu_custom_call.1} parent=1 // loop_footer_branch
      %17 = sbr.rel target = $region3
    $region8: #{tpu_custom_call.1} parent=1 // loop_exit
      _
    %508 = vsyncpa [#allocation3], 1
    %s509 = scalar_lea.sflag [#allocation3], 1
    %510 = vsyncpa %s509, 1
    %511 = vsyncpa [#allocation6], 1
    %512 = vsyncpa [#allocation4], 1
    %s513 = scalar_lea.sflag [#allocation4], 1
    %514 = vsyncpa %s513, 1

</llo_original>
